<compile_context>
chip_gen: v6e
topology: v6e:2x2x1
jax: 0.10.0
libtpu: 0.0.40
codegen_flags: <defaults>
</compile_context>

<pallas_src>
import functools

import jax
import jax.numpy as jnp
from jax import lax
from jax.experimental import pallas as pl
from jax.experimental.pallas import tpu as pltpu


# ----------------------------------------------------------------------------
# Pallas kernel:  o[C, m-tile] = scale[C,1] * leaky_relu(B[C,K] @ A[K, m-tile])
# ----------------------------------------------------------------------------
def _conv_mm_kernel(b_ref, s_ref, a_ref, o_ref):
    acc = jnp.dot(b_ref[...], a_ref[...], preferred_element_type=jnp.float32)
    act = jnp.where(acc >= 0.0, acc, 0.01 * acc)          # F.leaky_relu, slope 0.01
    o_ref[...] = (act * s_ref[...]).astype(o_ref.dtype)


def _fused_conv_matmul(patches_t, w_t, scale_vec, tm_max=512):
    """patches_t: (K, M) bf16, w_t: (C, K) bf16, scale_vec: (C,) f32.

    Returns (C, M) f32 = scale * leaky_relu(w_t @ patches_t), tiled over M.
    The lane dim of every operand/output is the big M (or K) axis -> dense
    vector stores, no padded-column writeback.
    """
    k_dim, m_dim = patches_t.shape
    c_dim = w_t.shape[0]

    c_pad = ((c_dim + 7) // 8) * 8
    k_pad = pl.cdiv(k_dim, 128) * 128
    tm = min(tm_max, pl.cdiv(m_dim, 128) * 128)
    m_pad = pl.cdiv(m_dim, tm) * tm

    a = jnp.pad(patches_t, ((0, k_pad - k_dim), (0, m_pad - m_dim)))
    b = jnp.pad(w_t, ((0, c_pad - c_dim), (0, k_pad - k_dim)))
    s = jnp.pad(scale_vec.astype(jnp.float32), (0, c_pad - c_dim),
                constant_values=1.0).reshape(c_pad, 1)

    out = pl.pallas_call(
        _conv_mm_kernel,
        out_shape=jax.ShapeDtypeStruct((c_pad, m_pad), jnp.float32),
        grid=(m_pad // tm,),
        in_specs=[
            pl.BlockSpec((c_pad, k_pad), lambda i: (0, 0)),   # fused weights (resident)
            pl.BlockSpec((c_pad, 1), lambda i: (0, 0)),       # per-channel scale
            pl.BlockSpec((k_pad, tm), lambda i: (0, i)),      # patches tile (lane = M)
        ],
        out_specs=pl.BlockSpec((c_pad, tm), lambda i: (0, i)),
        compiler_params=pltpu.CompilerParams(
            dimension_semantics=("parallel",),
            vmem_limit_bytes=32 * 1024 * 1024),
    )(b, s, a)
    return out[:c_dim, :m_dim]


# ----------------------------------------------------------------------------
# im2col glue (plain JAX) — matches PyTorch Conv3d (zero padding, no dilation).
# Emits bf16 patches transposed to (K, M) so K order matches w.reshape(Cout,-1)
# and M is the lane-dense axis of the kernel.
# TODO(synk): patches are still materialized in HBM (~27x the input); a fully
# implicit in-kernel im2col (manual DMA gather from a pl.ANY-resident x) would
# remove that round-trip but is not implemented here.
# ----------------------------------------------------------------------------
def _im2col3d_t(x, ksize, stride, padding):
    kT, kH, kW = ksize
    sT, sH, sW = stride
    pT, pH, pW = padding
    xp = jnp.pad(x.astype(jnp.bfloat16),
                 ((0, 0), (0, 0), (pT, pT), (pH, pH), (pW, pW)))
    n, c, tp, hp, wp = xp.shape
    to = (tp - kT) // sT + 1
    ho = (hp - kH) // sH + 1
    wo = (wp - kW) // sW + 1
    taps = []
    for kt in range(kT):
        for kh in range(kH):
            for kw in range(kW):
                taps.append(xp[:, :,
                               kt:kt + to * sT:sT,
                               kh:kh + ho * sH:sH,
                               kw:kw + wo * sW:sW])
    cols = jnp.stack(taps, axis=0)                     # (taps, N, C, To, Ho, Wo)
    cols = jnp.transpose(cols, (2, 0, 1, 3, 4, 5))     # (C, taps, N, To, Ho, Wo)
    patches_t = cols.reshape(c * kT * kH * kW, n * to * ho * wo)   # (K, M)
    return patches_t, (n, to, ho, wo)


# ----------------------------------------------------------------------------
# FEM forward
# ----------------------------------------------------------------------------
def fem_forward(x, params, halving, stride, padding):
    w_ge1, w_ge2 = params["conv_ge1"], params["conv_ge2"]
    w_le1, w_le2 = params["conv_le1"], params["conv_le2"]
    w_scalar = jnp.asarray(params["w"], jnp.float32).reshape(())
    cout = w_ge1.shape[0]
    ksize = tuple(w_ge1.shape[2:])

    def flat(w):                                       # (Cout, K) bf16
        return w.reshape(cout, -1).astype(jnp.bfloat16)

    # ge1 / ge2 / le2 (and le1 when halving == 0) share the same im2col of x,
    # so they are fused into one weight matrix and ONE pallas_call. leaky_relu
    # and the `w` scaling are elementwise and commute with the concats below,
    # so they are fused into the kernel epilogue (per-channel scale vector).
    branch_ws = [flat(w_ge1), flat(w_ge2), flat(w_le2)]
    if halving == 0:
        branch_ws.append(flat(w_le1))
    w_fused = jnp.concatenate(branch_ws, axis=0)       # (n_branch*Cout, K)
    ones_c = jnp.ones((cout,), jnp.float32)
    scales = jnp.concatenate(
        [w_scalar * ones_c, w_scalar * ones_c] + [ones_c] * (len(branch_ws) - 2))

    patches_t, (n, to, ho, wo) = _im2col3d_t(x, ksize, stride, padding)
    out = _fused_conv_matmul(patches_t, w_fused, scales)   # (n_branch*Cout, M)
    out = out.reshape(len(branch_ws) * cout, n, to, ho, wo)
    out = jnp.transpose(out, (1, 0, 2, 3, 4))              # (N, C*, To, Ho, Wo)

    y_ge1 = out[:, 0 * cout:1 * cout]
    y_ge2 = out[:, 1 * cout:2 * cout]
    y_le2 = out[:, 2 * cout:3 * cout]

    if halving == 0:
        y_le1 = out[:, 3 * cout:4 * cout]
    else:
        # conv_le1 over H-splits of x: stack all chunks along the batch/M axis
        # and run a SINGLE pallas_call for all of them.
        nb, cin, t_in, h_in, w_in = x.shape
        split = int(h_in // 2 ** halving)
        # TODO(synk): ragged final chunk (H not divisible by 2**halving) unsupported.
        assert h_in % split == 0
        n_chunks = h_in // split
        xc = x.reshape(nb, cin, t_in, n_chunks, split, w_in)
        xc = jnp.transpose(xc, (3, 0, 1, 2, 4, 5)).reshape(
            n_chunks * nb, cin, t_in, split, w_in)
        patches_c, (_, to_c, ho_c, wo_c) = _im2col3d_t(xc, ksize, stride, padding)
        out_c = _fused_conv_matmul(patches_c, flat(w_le1), ones_c)   # (Cout, Mc)
        out_c = out_c.reshape(cout, n_chunks, nb, to_c, ho_c, wo_c)
        y_le1 = jnp.transpose(out_c, (2, 0, 3, 1, 4, 5)).reshape(
            nb, cout, to_c, n_chunks * ho_c, wo_c)

    y_ge = jnp.concatenate([y_ge1, y_ge2], axis=3)     # `w` already applied in-kernel
    y_le = jnp.concatenate([y_le2, y_le1], axis=3)
    return jnp.concatenate([y_ge, y_le], axis=1)


# ----------------------------------------------------------------------------
# Pure-JAX reference (XLA conv, full f32) for correctness checking
# ----------------------------------------------------------------------------
def _ref_conv3d(x, w, stride, padding):
    return lax.conv_general_dilated(
        x, w, window_strides=stride,
        padding=[(p, p) for p in padding],
        dimension_numbers=("NCDHW", "OIDHW", "NCDHW"),
        precision=lax.Precision.HIGHEST)


def _ref_fem(x, params, halving, stride, padding):
    leaky = lambda z: jnp.where(z >= 0, z, 0.01 * z)
    if halving == 0:
        y_le1 = _ref_conv3d(x, params["conv_le1"], stride, padding)
    else:
        h = x.shape[3]
        ss = int(h // 2 ** halving)
        chunks = [x[:, :, :, i:i + ss, :] for i in range(0, h, ss)]
        y_le1 = jnp.concatenate(
            [_ref_conv3d(c, params["conv_le1"], stride, padding) for c in chunks],
            axis=3)
    y_le2 = _ref_conv3d(x, params["conv_le2"], stride, padding)
    y_le = leaky(jnp.concatenate([y_le2, y_le1], axis=3))
    y_ge1 = _ref_conv3d(x, params["conv_ge1"], stride, padding)
    y_ge2 = _ref_conv3d(x, params["conv_ge2"], stride, padding)
    y_ge = leaky(jnp.concatenate([y_ge1, y_ge2], axis=3))
    return jnp.concatenate([params["w"] * y_ge, y_le], axis=1)


if __name__ == "__main__":
    # Small shapes consistent with the module: x is (N, C, T, H, W).
    N, Cin, Cout = 2, 4, 4
    T, H, W = 4, 16, 8
    ksize, stride, padding = (3, 3, 3), (1, 1, 1), (1, 1, 1)

    key = jax.random.PRNGKey(0)
    kx, k1, k2, k3, k4 = jax.random.split(key, 5)
    x = jax.random.normal(kx, (N, Cin, T, H, W), jnp.float32)

    def w_init(k):
        return 0.1 * jax.random.normal(k, (Cout, Cin) + ksize, jnp.float32)

    params = {
        "conv_ge1": w_init(k1),
        "conv_ge2": w_init(k2),
        "conv_le1": w_init(k3),
        "conv_le2": w_init(k4),
        "w": jnp.float32(6.0),          # nn.Parameter(torch.ones(1) * 6)
    }

    for halving in (1, 0):
        fwd = jax.jit(functools.partial(
            fem_forward, halving=halving, stride=stride, padding=padding))
        y = jax.block_until_ready(fwd(x, params))
        assert y.shape == (N, 2 * Cout, T, 2 * H, W), y.shape

        y_ref = _ref_fem(x, params, halving, stride, padding)
        rel = float(jnp.linalg.norm(y - y_ref) / jnp.linalg.norm(y_ref))
        mae = float(jnp.max(jnp.abs(y - y_ref)))
        # bf16 operands / f32 accumulation vs full-f32 XLA reference.
        if not (rel < 1e-2 and mae < 0.25):
            raise AssertionError(
                f"halving={halving}: rel_fro_err={rel:.3e} max_abs_err={mae:.3e}")

    print("KERNEL_OK")
</pallas_src>

<mosaic_0001>
module attributes {stable_mosaic.version = 11 : i64} {
  func.func @_conv_mm_kernel(%arg0: i32, %arg1: memref<8x128xbf16, #tpu.memory_space<vmem>>, %arg2: memref<8x1xf32, #tpu.memory_space<vmem>>, %arg3: memref<128x512xbf16, #tpu.memory_space<vmem>>, %arg4: memref<8x512xf32, #tpu.memory_space<vmem>>) attributes {dimension_semantics = [#tpu.dimension_semantics<parallel>], iteration_bounds = array<i64: 2>, scalar_prefetch = 0 : i64, scratch_operands = 0 : i64, tpu.core_type = #tpu.core_type<tc>, window_params = [{pipeline_mode = #tpu.pipeline_mode<synchronous>, transform_indices = @transform_0, window_bounds = array<i64: 8, 128>}, {pipeline_mode = #tpu.pipeline_mode<synchronous>, transform_indices = @transform_1, window_bounds = array<i64: 8, 1>}, {transform_indices = @transform_2, window_bounds = array<i64: 128, 512>}, {transform_indices = @transform_3, window_bounds = array<i64: 8, 512>}]} {
    %c0 = arith.constant 0 : index
    %c0_0 = arith.constant 0 : index
    %0 = vector.load %arg1[%c0, %c0_0] : memref<8x128xbf16, #tpu.memory_space<vmem>>, vector<8x128xbf16>
    %c0_1 = arith.constant 0 : index
    %c0_2 = arith.constant 0 : index
    %1 = vector.load %arg3[%c0_1, %c0_2] : memref<128x512xbf16, #tpu.memory_space<vmem>>, vector<128x512xbf16>
    %cst = arith.constant dense<0.000000e+00> : vector<8x512xf32>
    %2 = tpu.matmul %0, %1, %cst {dimension_numbers = #tpu.dot_dimension_numbers<[1], [0], [0], [1], [0, 0, 1, 1], [], []>} : vector<8x128xbf16>, vector<128x512xbf16>, vector<8x512xf32> -> vector<8x512xf32>
    %cst_3 = arith.constant 0.000000e+00 : f32
    %3 = vector.broadcast %cst_3 : f32 to vector<8x512xf32>
    %4 = arith.cmpf oge, %2, %3 : vector<8x512xf32>
    %cst_4 = arith.constant 0.00999999977 : f32
    %5 = vector.broadcast %cst_4 : f32 to vector<8x512xf32>
    %6 = arith.mulf %5, %2 : vector<8x512xf32>
    %7 = arith.select %4, %2, %6 : vector<8x512xi1>, vector<8x512xf32>
    %c0_5 = arith.constant 0 : index
    %c0_6 = arith.constant 0 : index
    %8 = vector.load %arg2[%c0_5, %c0_6] : memref<8x1xf32, #tpu.memory_space<vmem>>, vector<8x1xf32>
    %9 = vector.broadcast %8 : vector<8x1xf32> to vector<8x512xf32>
    %10 = arith.mulf %7, %9 : vector<8x512xf32>
    %c0_7 = arith.constant 0 : index
    %c0_8 = arith.constant 0 : index
    %11 = vector.load %arg4[%c0_7, %c0_8] : memref<8x512xf32, #tpu.memory_space<vmem>>, vector<8x512xf32>
    tpu.vector_store %arg4[%c0_7, %c0_8], %10 {strides = array<i32>} : memref<8x512xf32, #tpu.memory_space<vmem>>, vector<8x512xf32>,
    return
  }
  func.func @transform_0(%arg0: i32) -> (i32, i32) {
    %c0_i32 = arith.constant 0 : i32
    %c0_i32_0 = arith.constant 0 : i32
    %c0_i32_1 = arith.constant 0 : i32
    return %c0_i32, %c0_i32_0 : i32, i32
  }
  func.func @transform_1(%arg0: i32) -> (i32, i32) {
    %c0_i32 = arith.constant 0 : i32
    %c0_i32_0 = arith.constant 0 : i32
    %c0_i32_1 = arith.constant 0 : i32
    return %c0_i32, %c0_i32_0 : i32, i32
  }
  func.func @transform_2(%arg0: i32) -> (i32, i32) {
    %c0_i32 = arith.constant 0 : i32
    %c0_i32_0 = arith.constant 0 : i32
    return %c0_i32, %arg0 : i32, i32
  }
  func.func @transform_3(%arg0: i32) -> (i32, i32) {
    %c0_i32 = arith.constant 0 : i32
    %c0_i32_0 = arith.constant 0 : i32
    return %c0_i32, %arg0 : i32, i32
  }
}

module attributes {stable_mosaic.version = 11 : i64} {
  func.func @_conv_mm_kernel(%arg0: i32, %arg1: memref<16x128xbf16, #tpu.memory_space<vmem>>, %arg2: memref<16x1xf32, #tpu.memory_space<vmem>>, %arg3: memref<128x512xbf16, #tpu.memory_space<vmem>>, %arg4: memref<16x512xf32, #tpu.memory_space<vmem>>) attributes {dimension_semantics = [#tpu.dimension_semantics<parallel>], iteration_bounds = array<i64: 2>, scalar_prefetch = 0 : i64, scratch_operands = 0 : i64, tpu.core_type = #tpu.core_type<tc>, window_params = [{pipeline_mode = #tpu.pipeline_mode<synchronous>, transform_indices = @transform_0, window_bounds = array<i64: 16, 128>}, {pipeline_mode = #tpu.pipeline_mode<synchronous>, transform_indices = @transform_1, window_bounds = array<i64: 16, 1>}, {transform_indices = @transform_2, window_bounds = array<i64: 128, 512>}, {transform_indices = @transform_3, window_bounds = array<i64: 16, 512>}]} {
    %c0 = arith.constant 0 : index
    %c0_0 = arith.constant 0 : index
    %0 = vector.load %arg1[%c0, %c0_0] : memref<16x128xbf16, #tpu.memory_space<vmem>>, vector<16x128xbf16>
    %c0_1 = arith.constant 0 : index
    %c0_2 = arith.constant 0 : index
    %1 = vector.load %arg3[%c0_1, %c0_2] : memref<128x512xbf16, #tpu.memory_space<vmem>>, vector<128x512xbf16>
    %cst = arith.constant dense<0.000000e+00> : vector<16x512xf32>
    %2 = tpu.matmul %0, %1, %cst {dimension_numbers = #tpu.dot_dimension_numbers<[1], [0], [0], [1], [0, 0, 1, 1], [], []>} : vector<16x128xbf16>, vector<128x512xbf16>, vector<16x512xf32> -> vector<16x512xf32>
    %cst_3 = arith.constant 0.000000e+00 : f32
    %3 = vector.broadcast %cst_3 : f32 to vector<16x512xf32>
    %4 = arith.cmpf oge, %2, %3 : vector<16x512xf32>
    %cst_4 = arith.constant 0.00999999977 : f32
    %5 = vector.broadcast %cst_4 : f32 to vector<16x512xf32>
    %6 = arith.mulf %5, %2 : vector<16x512xf32>
    %7 = arith.select %4, %2, %6 : vector<16x512xi1>, vector<16x512xf32>
    %c0_5 = arith.constant 0 : index
    %c0_6 = arith.constant 0 : index
    %8 = vector.load %arg2[%c0_5, %c0_6] : memref<16x1xf32, #tpu.memory_space<vmem>>, vector<16x1xf32>
    %9 = vector.broadcast %8 : vector<16x1xf32> to vector<16x512xf32>
    %10 = arith.mulf %7, %9 : vector<16x512xf32>
    %c0_7 = arith.constant 0 : index
    %c0_8 = arith.constant 0 : index
    %11 = vector.load %arg4[%c0_7, %c0_8] : memref<16x512xf32, #tpu.memory_space<vmem>>, vector<16x512xf32>
    tpu.vector_store %arg4[%c0_7, %c0_8], %10 {strides = array<i32>} : memref<16x512xf32, #tpu.memory_space<vmem>>, vector<16x512xf32>,
    return
  }
  func.func @transform_0(%arg0: i32) -> (i32, i32) {
    %c0_i32 = arith.constant 0 : i32
    %c0_i32_0 = arith.constant 0 : i32
    %c0_i32_1 = arith.constant 0 : i32
    return %c0_i32, %c0_i32_0 : i32, i32
  }
  func.func @transform_1(%arg0: i32) -> (i32, i32) {
    %c0_i32 = arith.constant 0 : i32
    %c0_i32_0 = arith.constant 0 : i32
    %c0_i32_1 = arith.constant 0 : i32
    return %c0_i32, %c0_i32_0 : i32, i32
  }
  func.func @transform_2(%arg0: i32) -> (i32, i32) {
    %c0_i32 = arith.constant 0 : i32
    %c0_i32_0 = arith.constant 0 : i32
    return %c0_i32, %arg0 : i32, i32
  }
  func.func @transform_3(%arg0: i32) -> (i32, i32) {
    %c0_i32 = arith.constant 0 : i32
    %c0_i32_0 = arith.constant 0 : i32
    return %c0_i32, %arg0 : i32, i32
  }
}

</mosaic_0001>

<llo_original>
// kernel: fem_forward.3
$region0: #{fem_forward.3}
  #allocation0 [shape = 'u32[]', space=smem, size = 0x4, offset = 0x4, fixed_abs, tag = 'smem constant byte address 0x4 - core index']
  #allocation1 [shape = 'u32[144,128]{1,0:T(1,128)}', space=vmem, size = 0x12000, scoped, tag = 'internal scratch']
  %s0 = inlined_call_operand.vmem [shape: bf16[8,128], index: 0, kind: input, shape index: {}]
  %s1 = inlined_call_operand.vmem [shape: f32[8,1], index: 1, kind: input, shape index: {}]
  %s2 = inlined_call_operand.vmem [shape: bf16[128,1024], index: 2, kind: input, shape index: {}]
  %s3 = inlined_call_operand.vmem [shape: f32[8,1024], index: 3, kind: output, shape index: {}]
  %s4 = sld [smem:[#allocation0]]
  $region68: #{fem_forward.3} parent=0
    _
  %s6 = ssub.s32 1, %s4
  %s7 = scalar_select 0, %s6, %s4
  $region1: #{fem_forward.3} parent=0
    #allocation2 [shape = 'u8[262144]{0}', space=vmem, size = 0x40000, scoped, tag = 'input window, operand 2']
    loop: start=0, step=1, limit=4
    $region2: #{fem_forward.3} parent=1 // loop_pre_header
      _
    $region3: #{fem_forward.3} parent=1 // loop_header
      %s9 = sphi 0, %s13
      %p10 = scmp.ge.s32.totalorder %s9, 4
      %s17 = sphi 0, %s17
      %s19 = sphi 0, %s17
      %s20 = sphi 0, %s19
      %s34 = sphi 0, %s20
      %s38 = sphi 0, %s38
      %s40 = sphi 0, %s38
      %s41 = sphi 0, %s40
      %s55 = sphi 0, %s41
      %s61 = sphi 0, %s63
      %s64 = sphi 0, %s61
      %s65 = sphi 0, %s64
      %s81 = sphi 0, %s65
      %s87 = sphi 0, %s89
      %s90 = sphi 0, %s87
      %s91 = sphi 0, %s90
      %s107 = sphi 0, %s91
    $region4: #{fem_forward.3} parent=1 // loop_header_branch
      %12 = sbr.rel (%p10) target = $region8
    $region5: #{fem_forward.3} parent=1 // loop_body
      %s14 = ssub.s32 %s9, 1
      %s15 = ssub.s32 %s9, 2
      %s16 = sadd.s32 %s9, 1
      %s18 = sadd.s32 %s17, 1
      %p21 = scmp.eq.s32.totalorder %s9, 1
      %p22 = scmp.ne.s32.totalorder %s17, %s19
      %p23 = scmp.eq.s32.totalorder %s9, 0
      %p24 = por %p22, %p23
      %p25 = scmp.ne.s32.totalorder %s17, %s19
      %p26 = scmp.eq.s32.totalorder %s14, 1
      %p27 = por %p25, %p26
      %p28 = scmp.ne.s32.totalorder %s19, %s20
      %p29 = scmp.eq.s32.totalorder %s14, 0
      %p30 = por %p28, %p29
      %p31 = scmp.ne.s32.totalorder %s19, %s20
      %p32 = scmp.eq.s32.totalorder %s15, 1
      %p33 = por %p31, %p32
      %p35 = scmp.ne.s32.totalorder %s20, %s34
      %p36 = scmp.eq.s32.totalorder %s15, 0
      %p37 = por %p35, %p36
      %s39 = sadd.s32 %s38, 1
      %p42 = scmp.eq.s32.totalorder %s9, 1
      %p43 = scmp.ne.s32.totalorder %s38, %s40
      %p44 = scmp.eq.s32.totalorder %s9, 0
      %p45 = por %p43, %p44
      %p46 = scmp.ne.s32.totalorder %s38, %s40
      %p47 = scmp.eq.s32.totalorder %s14, 1
      %p48 = por %p46, %p47
      %p49 = scmp.ne.s32.totalorder %s40, %s41
      %p50 = scmp.eq.s32.totalorder %s14, 0
      %p51 = por %p49, %p50
      %p52 = scmp.ne.s32.totalorder %s40, %s41
      %p53 = scmp.eq.s32.totalorder %s15, 1
      %p54 = por %p52, %p53
      %p56 = scmp.ne.s32.totalorder %s41, %s55
      %p57 = scmp.eq.s32.totalorder %s15, 0
      %p58 = por %p56, %p57
      %s59 = ssub.s32 %s9, %s16
      %p60 = scmp.eq.s32.totalorder %s59, 0
      %s62 = sadd.s32 %s61, 1
      %s63 = scalar_select %p60, %s61, %s62
      %p66 = pneg %p60
      %p67 = scmp.eq.s32.totalorder %s9, 1
      %p68 = por %p66, %p67
      %p69 = scmp.ne.s32.totalorder %s61, %s64
      %p70 = scmp.eq.s32.totalorder %s9, 0
      %p71 = por %p69, %p70
      %p72 = scmp.ne.s32.totalorder %s61, %s64
      %p73 = scmp.eq.s32.totalorder %s14, 1
      %p74 = por %p72, %p73
      %p75 = scmp.ne.s32.totalorder %s64, %s65
      %p76 = scmp.eq.s32.totalorder %s14, 0
      %p77 = por %p75, %p76
      %p78 = scmp.ne.s32.totalorder %s64, %s65
      %p79 = scmp.eq.s32.totalorder %s15, 1
      %p80 = por %p78, %p79
      %p82 = scmp.ne.s32.totalorder %s65, %s81
      %p83 = scmp.eq.s32.totalorder %s15, 0
      %p84 = por %p82, %p83
      %s85 = ssub.s32 %s9, %s16
      %p86 = scmp.eq.s32.totalorder %s85, 0
      %s88 = sadd.s32 %s87, 1
      %s89 = scalar_select %p86, %s87, %s88
      %p92 = pneg %p86
      %p93 = scmp.eq.s32.totalorder %s9, 1
      %p94 = por %p92, %p93
      %p95 = scmp.ne.s32.totalorder %s87, %s90
      %p96 = scmp.eq.s32.totalorder %s9, 0
      %p97 = por %p95, %p96
      %p98 = scmp.ne.s32.totalorder %s87, %s90
      %p99 = scmp.eq.s32.totalorder %s14, 1
      %p100 = por %p98, %p99
      %p101 = scmp.ne.s32.totalorder %s90, %s91
      %p102 = scmp.eq.s32.totalorder %s14, 0
      %p103 = por %p101, %p102
      %p104 = scmp.ne.s32.totalorder %s90, %s91
      %p105 = scmp.eq.s32.totalorder %s15, 1
      %p106 = por %p104, %p105
      %p108 = scmp.ne.s32.totalorder %s91, %s107
      %p109 = scmp.eq.s32.totalorder %s15, 0
      %p110 = por %p108, %p109
      %p111 = scmp.le.s32.totalorder 1, %s9
      %p112 = scmp.lt.s32.totalorder %s9, 3
      %p113 = pnand %p111, %p112
      %p114 = pneg %p113
      // Predicated region
      $region9: #{fem_forward.3} parent=5 // pred_check
        _
      $region10: #{fem_forward.3} parent=5 // pred_check_branch
        %116 = sbr.rel (%p113) target = $region12
      $region11: #{fem_forward.3} parent=5 // pred_region
        %s117 = ssub.s32 %s9, 1
        // Predicated region
        $region13: #{fem_forward.3} parent=11 // pred_check
          %p118 = pneg %p30
        $region14: #{fem_forward.3} parent=11 // pred_check_branch
          %120 = sbr.rel (%p118) target = $region16
        $region15: #{fem_forward.3} parent=11 // pred_region
          _
        $region16: #{fem_forward.3} parent=11 // pred_fallthru
          _
        // Predicated region
        $region17: #{fem_forward.3} parent=11 // pred_check
          %p121 = pneg %p51
        $region18: #{fem_forward.3} parent=11 // pred_check_branch
          %123 = sbr.rel (%p121) target = $region20
        $region19: #{fem_forward.3} parent=11 // pred_region
          _
        $region20: #{fem_forward.3} parent=11 // pred_fallthru
          _
      $region12: #{fem_forward.3} parent=5 // pred_fallthru
        _
      %p124 = scmp.lt.s32.totalorder %s9, 2
      // Predicated region
      $region21: #{fem_forward.3} parent=5 // pred_check
        %p125 = pneg %p124
      $region22: #{fem_forward.3} parent=5 // pred_check_branch
        %127 = sbr.rel (%p125) target = $region24
      $region23: #{fem_forward.3} parent=5 // pred_region
        // Predicated region
        $region25: #{fem_forward.3} parent=23 // pred_check
          %p128 = pneg %p71
        $region26: #{fem_forward.3} parent=23 // pred_check_branch
          %130 = sbr.rel (%p128) target = $region28
        $region27: #{fem_forward.3} parent=23 // pred_region
          %s131 = sand.u32 %s61, 1
          %s132 = sand.u32 %s61, 1
          %s133 = smul.addr %s132, 256
          %s134 = scalar_lea.vmem [#allocation2], %s133
          %s135 = smul.u32 4, %s9
          %s136 = smul.addr %s135, 4
          %s137 = scalar_lea.vmem %s2, %s136
          // Predicated region
          $region29: #{fem_forward.3} parent=27 // pred_check
            _
          $region30: #{fem_forward.3} parent=27 // pred_check_branch
            %139 = sbr.rel (0) target = $region32
          $region31: #{fem_forward.3} parent=27 // pred_region
            // Predicated region
            $region33: #{fem_forward.3} parent=31 // pred_check
              _
            $region34: #{fem_forward.3} parent=31 // pred_check_branch
              %141 = sbr.rel (0) target = $region36
            $region35: #{fem_forward.3} parent=31 // pred_region
              loop: start=0, step=1, limit=1
              $region37: #{fem_forward.3} parent=35 // loop_pre_header
                _
              $region38: #{fem_forward.3} parent=35 // loop_header
                %s143 = sphi 0, %s147
                %p144 = scmp.ge.s32.totalorder %s143, 1
                %s148 = sphi %s137, %s137
                %s149 = sphi %s134, %s134
              $region39: #{fem_forward.3} parent=35 // loop_header_branch
                %146 = sbr.rel (%p144) target = $region43
              $region40: #{fem_forward.3} parent=35 // loop_body
                %v150 = vld [vmem:[%s148] sm:$0xff]
                %151 = vst [vmem:[%s149] sm:$0xff] %v150
                %v152 = vld [vmem:[%s148 + $0x8] sm:$0xff]
                %153 = vst [vmem:[%s149 + $0x8] sm:$0xff] %v152
                %v154 = vld [vmem:[%s148 + $0x20] sm:$0xff]
                %155 = vst [vmem:[%s149 + $0x10] sm:$0xff] %v154
                %v156 = vld [vmem:[%s148 + $0x28] sm:$0xff]
                %157 = vst [vmem:[%s149 + $0x18] sm:$0xff] %v156
                %v158 = vld [vmem:[%s148 + $0x40] sm:$0xff]
                %159 = vst [vmem:[%s149 + $0x20] sm:$0xff] %v158
                %v160 = vld [vmem:[%s148 + $0x48] sm:$0xff]
                %161 = vst [vmem:[%s149 + $0x28] sm:$0xff] %v160
                %v162 = vld [vmem:[%s148 + $0x60] sm:$0xff]
                %163 = vst [vmem:[%s149 + $0x30] sm:$0xff] %v162
                %v164 = vld [vmem:[%s148 + $0x68] sm:$0xff]
                %165 = vst [vmem:[%s149 + $0x38] sm:$0xff] %v164
                %v166 = vld [vmem:[%s148 + $0x80] sm:$0xff]
                %167 = vst [vmem:[%s149 + $0x40] sm:$0xff] %v166
                %v168 = vld [vmem:[%s148 + $0x88] sm:$0xff]
                %169 = vst [vmem:[%s149 + $0x48] sm:$0xff] %v168
                %v170 = vld [vmem:[%s148 + $0xa0] sm:$0xff]
                %171 = vst [vmem:[%s149 + $0x50] sm:$0xff] %v170
                %v172 = vld [vmem:[%s148 + $0xa8] sm:$0xff]
                %173 = vst [vmem:[%s149 + $0x58] sm:$0xff] %v172
                %v174 = vld [vmem:[%s148 + $0xc0] sm:$0xff]
                %175 = vst [vmem:[%s149 + $0x60] sm:$0xff] %v174
                %v176 = vld [vmem:[%s148 + $0xc8] sm:$0xff]
                %177 = vst [vmem:[%s149 + $0x68] sm:$0xff] %v176
                %v178 = vld [vmem:[%s148 + $0xe0] sm:$0xff]
                %179 = vst [vmem:[%s149 + $0x70] sm:$0xff] %v178
                %v180 = vld [vmem:[%s148 + $0xe8] sm:$0xff]
                %181 = vst [vmem:[%s149 + $0x78] sm:$0xff] %v180
                %v182 = vld [vmem:[%s148 + $0x100] sm:$0xff]
                %183 = vst [vmem:[%s149 + $0x80] sm:$0xff] %v182
                %v184 = vld [vmem:[%s148 + $0x108] sm:$0xff]
                %185 = vst [vmem:[%s149 + $0x88] sm:$0xff] %v184
                %v186 = vld [vmem:[%s148 + $0x120] sm:$0xff]
                %187 = vst [vmem:[%s149 + $0x90] sm:$0xff] %v186
                %v188 = vld [vmem:[%s148 + $0x128] sm:$0xff]
                %189 = vst [vmem:[%s149 + $0x98] sm:$0xff] %v188
                %v190 = vld [vmem:[%s148 + $0x140] sm:$0xff]
                %191 = vst [vmem:[%s149 + $0xa0] sm:$0xff] %v190
                %v192 = vld [vmem:[%s148 + $0x148] sm:$0xff]
                %193 = vst [vmem:[%s149 + $0xa8] sm:$0xff] %v192
                %v194 = vld [vmem:[%s148 + $0x160] sm:$0xff]
                %195 = vst [vmem:[%s149 + $0xb0] sm:$0xff] %v194
                %v196 = vld [vmem:[%s148 + $0x168] sm:$0xff]
                %197 = vst [vmem:[%s149 + $0xb8] sm:$0xff] %v196
                %v198 = vld [vmem:[%s148 + $0x180] sm:$0xff]
                %199 = vst [vmem:[%s149 + $0xc0] sm:$0xff] %v198
                %v200 = vld [vmem:[%s148 + $0x188] sm:$0xff]
                %201 = vst [vmem:[%s149 + $0xc8] sm:$0xff] %v200
                %v202 = vld [vmem:[%s148 + $0x1a0] sm:$0xff]
                %203 = vst [vmem:[%s149 + $0xd0] sm:$0xff] %v202
                %v204 = vld [vmem:[%s148 + $0x1a8] sm:$0xff]
                %205 = vst [vmem:[%s149 + $0xd8] sm:$0xff] %v204
                %v206 = vld [vmem:[%s148 + $0x1c0] sm:$0xff]
                %207 = vst [vmem:[%s149 + $0xe0] sm:$0xff] %v206
                %v208 = vld [vmem:[%s148 + $0x1c8] sm:$0xff]
                %209 = vst [vmem:[%s149 + $0xe8] sm:$0xff] %v208
                %v210 = vld [vmem:[%s148 + $0x1e0] sm:$0xff]
                %211 = vst [vmem:[%s149 + $0xf0] sm:$0xff] %v210
                %v212 = vld [vmem:[%s148 + $0x1e8] sm:$0xff]
                %213 = vst [vmem:[%s149 + $0xf8] sm:$0xff] %v212
              $region41: #{fem_forward.3} parent=35 // loop_footer
                %s147 = sadd.s32 1, %s143
              $region42: #{fem_forward.3} parent=35 // loop_footer_branch
                %142 = sbr.rel target = $region38
              $region43: #{fem_forward.3} parent=35 // loop_exit
                _
            $region36: #{fem_forward.3} parent=31 // pred_fallthru
              _
            // Predicated region
            $region44: #{fem_forward.3} parent=31 // pred_check
              _
            $region45: #{fem_forward.3} parent=31 // pred_check_branch
              %215 = sbr.rel target = $region47
            $region46: #{fem_forward.3} parent=31 // pred_region
              _
            $region47: #{fem_forward.3} parent=31 // pred_fallthru
              _
          $region32: #{fem_forward.3} parent=27 // pred_fallthru
            _
          %216 = vnop
        $region28: #{fem_forward.3} parent=23 // pred_fallthru
          _
      $region24: #{fem_forward.3} parent=5 // pred_fallthru
        _
      %p217 = scmp.le.s32.totalorder 1, %s9
      %p218 = scmp.lt.s32.totalorder %s9, 3
      %p219 = pnand %p217, %p218
      %p220 = pneg %p219
      // Predicated region
      $region48: #{fem_forward.3} parent=5 // pred_check
        _
      $region49: #{fem_forward.3} parent=5 // pred_check_branch
        %222 = sbr.rel (%p219) target = $region51
      $region50: #{fem_forward.3} parent=5 // pred_region
        %s223 = ssub.s32 %s9, 1
        %s224 = sand.u32 %s64, 1
        %s225 = sand.u32 %s64, 1
        %s226 = smul.addr %s225, 256
        %s227 = scalar_lea.vmem [#allocation2], %s226
        // Predicated region
        $region52: #{fem_forward.3} parent=50 // pred_check
          %p228 = pneg %p77
        $region53: #{fem_forward.3} parent=50 // pred_check_branch
          %230 = sbr.rel (%p228) target = $region55
        $region54: #{fem_forward.3} parent=50 // pred_region
          _
        $region55: #{fem_forward.3} parent=50 // pred_fallthru
          _
        %p231 = pneg %p30
        %p232 = pneg %p27
        %p233 = pneg %p51
        %p234 = pneg %p48
        %s235 = sand.u32 %s64, 1
        %s236 = sand.u32 %s64, 1
        %s237 = smul.addr %s236, 256
        %s238 = scalar_lea.vmem [#allocation2], %s237
        %p239 = pneg %p77
        %p240 = pneg %p74
        %p241 = pneg %p103
        %p242 = pneg %p100
        %s243 = smul.u32 4, %s14
        %p244 = scmp.lt.s32.totalorder %s243, 7
        %s245 = scalar_select %p244, %s243, 7
        %s246 = smul.addr %s245, 8
        %s247 = scalar_lea.vmem %s3, %s246
        %s248 = smul.u32 4, %s14
        %s249 = smul.u32 4, %s14
        %p250 = scmp.lt.s32.totalorder %s249, 7
        %s251 = scalar_select %p250, %s249, 7
        %s252 = smul.addr %s251, 8
        %s253 = scalar_lea.vmem %s3, %s252
        %s254 = smul.u32 4, %s14
        %v256 = vld [vmem:[%s0] sm:$0xf]
        %v257 = vld [vmem:[%s227] sm:$0xff]
        %v258 = vld [vmem:[%s227 + $0x8] sm:$0xff]
        %v259 = vld [vmem:[%s227 + $0x10] sm:$0xff]
        %v260 = vld [vmem:[%s227 + $0x18] sm:$0xff]
        %v261 = vld [vmem:[%s227 + $0x20] sm:$0xff]
        %v262 = vld [vmem:[%s227 + $0x28] sm:$0xff]
        %v263 = vld [vmem:[%s227 + $0x30] sm:$0xff]
        %v264 = vld [vmem:[%s227 + $0x38] sm:$0xff]
        %v265 = vld [vmem:[%s227 + $0x40] sm:$0xff]
        %v266 = vld [vmem:[%s227 + $0x48] sm:$0xff]
        %v267 = vld [vmem:[%s227 + $0x50] sm:$0xff]
        %v268 = vld [vmem:[%s227 + $0x58] sm:$0xff]
        %v269 = vld [vmem:[%s227 + $0x60] sm:$0xff]
        %v270 = vld [vmem:[%s227 + $0x68] sm:$0xff]
        %v271 = vld [vmem:[%s227 + $0x70] sm:$0xff]
        %v272 = vld [vmem:[%s227 + $0x78] sm:$0xff]
        %v273 = vld [vmem:[%s227 + $0x80] sm:$0xff]
        %v274 = vld [vmem:[%s227 + $0x88] sm:$0xff]
        %v275 = vld [vmem:[%s227 + $0x90] sm:$0xff]
        %v276 = vld [vmem:[%s227 + $0x98] sm:$0xff]
        %v277 = vld [vmem:[%s227 + $0xa0] sm:$0xff]
        %v278 = vld [vmem:[%s227 + $0xa8] sm:$0xff]
        %v279 = vld [vmem:[%s227 + $0xb0] sm:$0xff]
        %v280 = vld [vmem:[%s227 + $0xb8] sm:$0xff]
        %v281 = vld [vmem:[%s227 + $0xc0] sm:$0xff]
        %v282 = vld [vmem:[%s227 + $0xc8] sm:$0xff]
        %v283 = vld [vmem:[%s227 + $0xd0] sm:$0xff]
        %v284 = vld [vmem:[%s227 + $0xd8] sm:$0xff]
        %v285 = vld [vmem:[%s227 + $0xe0] sm:$0xff]
        %v286 = vld [vmem:[%s227 + $0xe8] sm:$0xff]
        %v287 = vld [vmem:[%s227 + $0xf0] sm:$0xff]
        %v288 = vld [vmem:[%s227 + $0xf8] sm:$0xff]
        %v321 = vunpack.c.l.b16 %v257
        %v322 = vunpack.c.h.b16 %v257
        %v323 = vunpack.c.l.b16 %v258
        %v324 = vunpack.c.h.b16 %v258
        %v325 = vunpack.c.l.b16 %v259
        %v326 = vunpack.c.h.b16 %v259
        %v327 = vunpack.c.l.b16 %v260
        %v328 = vunpack.c.h.b16 %v260
        %v329 = vunpack.c.l.b16 %v261
        %v330 = vunpack.c.h.b16 %v261
        %v331 = vunpack.c.l.b16 %v262
        %v332 = vunpack.c.h.b16 %v262
        %v333 = vunpack.c.l.b16 %v263
        %v334 = vunpack.c.h.b16 %v263
        %v335 = vunpack.c.l.b16 %v264
        %v336 = vunpack.c.h.b16 %v264
        %v337 = vunpack.c.l.b16 %v265
        %v338 = vunpack.c.h.b16 %v265
        %v339 = vunpack.c.l.b16 %v266
        %v340 = vunpack.c.h.b16 %v266
        %v341 = vunpack.c.l.b16 %v267
        %v342 = vunpack.c.h.b16 %v267
        %v343 = vunpack.c.l.b16 %v268
        %v344 = vunpack.c.h.b16 %v268
        %v345 = vunpack.c.l.b16 %v269
        %v346 = vunpack.c.h.b16 %v269
        %v347 = vunpack.c.l.b16 %v270
        %v348 = vunpack.c.h.b16 %v270
        %v349 = vunpack.c.l.b16 %v271
        %v350 = vunpack.c.h.b16 %v271
        %v351 = vunpack.c.l.b16 %v272
        %v352 = vunpack.c.h.b16 %v272
        %v353 = vunpack.c.l.b16 %v273
        %v354 = vunpack.c.h.b16 %v273
        %v355 = vunpack.c.l.b16 %v274
        %v356 = vunpack.c.h.b16 %v274
        %v357 = vunpack.c.l.b16 %v275
        %v358 = vunpack.c.h.b16 %v275
        %v359 = vunpack.c.l.b16 %v276
        %v360 = vunpack.c.h.b16 %v276
        %v361 = vunpack.c.l.b16 %v277
        %v362 = vunpack.c.h.b16 %v277
        %v363 = vunpack.c.l.b16 %v278
        %v364 = vunpack.c.h.b16 %v278
        %v365 = vunpack.c.l.b16 %v279
        %v366 = vunpack.c.h.b16 %v279
        %v367 = vunpack.c.l.b16 %v280
        %v368 = vunpack.c.h.b16 %v280
        %v369 = vunpack.c.l.b16 %v281
        %v370 = vunpack.c.h.b16 %v281
        %v371 = vunpack.c.l.b16 %v282
        %v372 = vunpack.c.h.b16 %v282
        %v373 = vunpack.c.l.b16 %v283
        %v374 = vunpack.c.h.b16 %v283
        %v375 = vunpack.c.l.b16 %v284
        %v376 = vunpack.c.h.b16 %v284
        %v377 = vunpack.c.l.b16 %v285
        %v378 = vunpack.c.h.b16 %v285
        %v379 = vunpack.c.l.b16 %v286
        %v380 = vunpack.c.h.b16 %v286
        %v381 = vunpack.c.l.b16 %v287
        %v382 = vunpack.c.h.b16 %v287
        %v383 = vunpack.c.l.b16 %v288
        %v384 = vunpack.c.h.b16 %v288
        %v385 = vpack.c.b16 %v325, %v321
        %v386 = vpack.c.b16 %v326, %v322
        %v387 = vpack.c.b16 %v327, %v323
        %v388 = vpack.c.b16 %v328, %v324
        %v389 = vpack.c.b16 %v333, %v329
        %v390 = vpack.c.b16 %v334, %v330
        %v391 = vpack.c.b16 %v335, %v331
        %v392 = vpack.c.b16 %v336, %v332
        %v393 = vpack.c.b16 %v341, %v337
        %v394 = vpack.c.b16 %v342, %v338
        %v395 = vpack.c.b16 %v343, %v339
        %v396 = vpack.c.b16 %v344, %v340
        %v397 = vpack.c.b16 %v349, %v345
        %v398 = vpack.c.b16 %v350, %v346
        %v399 = vpack.c.b16 %v351, %v347
        %v400 = vpack.c.b16 %v352, %v348
        %v401 = vpack.c.b16 %v357, %v353
        %v402 = vpack.c.b16 %v358, %v354
        %v403 = vpack.c.b16 %v359, %v355
        %v404 = vpack.c.b16 %v360, %v356
        %v405 = vpack.c.b16 %v365, %v361
        %v406 = vpack.c.b16 %v366, %v362
        %v407 = vpack.c.b16 %v367, %v363
        %v408 = vpack.c.b16 %v368, %v364
        %v409 = vpack.c.b16 %v373, %v369
        %v410 = vpack.c.b16 %v374, %v370
        %v411 = vpack.c.b16 %v375, %v371
        %v412 = vpack.c.b16 %v376, %v372
        %v413 = vpack.c.b16 %v381, %v377
        %v414 = vpack.c.b16 %v382, %v378
        %v415 = vpack.c.b16 %v383, %v379
        %v416 = vpack.c.b16 %v384, %v380
        %449 = vmatprep.subr.bf16.mxu0 %v414
        %450 = vmatpush1.bf16.msra.mxu0 %v413
        %451 = vmatprep.subr.bf16.mxu0 %v410
        %452 = vmatpush1.bf16.msra.mxu0 %v409
        %453 = vmatprep.subr.bf16.mxu0 %v406
        %454 = vmatpush1.bf16.msra.mxu0 %v405
        %455 = vmatprep.subr.bf16.mxu0 %v402
        %456 = vmatpush1.bf16.msra.mxu0 %v401
        %457 = vmatprep.subr.bf16.mxu0 %v398
        %458 = vmatpush1.bf16.msra.mxu0 %v397
        %459 = vmatprep.subr.bf16.mxu0 %v394
        %460 = vmatpush1.bf16.msra.mxu0 %v393
        %461 = vmatprep.subr.bf16.mxu0 %v390
        %462 = vmatpush1.bf16.msra.mxu0 %v389
        %463 = vmatprep.subr.bf16.mxu0 %v386
        %464 = vmatpush1.bf16.msra.mxu0 %v385
        %465 = vmatprep.subr.bf16.mxu0 0
        %466 = vmatpush2.bf16.msra.mxu0 0
        %467 = vmatprep.subr.bf16.mxu0 0
        %468 = vmatpush2.bf16.msra.mxu0 0
        %469 = vmatprep.subr.bf16.mxu0 0
        %470 = vmatpush2.bf16.msra.mxu0 0
        %471 = vmatprep.subr.bf16.mxu0 0
        %472 = vmatpush2.bf16.msra.mxu0 0
        %473 = vmatprep.subr.bf16.mxu0 0
        %474 = vmatpush2.bf16.msra.mxu0 0
        %475 = vmatprep.subr.bf16.mxu0 0
        %476 = vmatpush2.bf16.msra.mxu0 0
        %477 = vmatprep.subr.bf16.mxu0 0
        %478 = vmatpush2.bf16.msra.mxu0 0
        %479 = vmatprep.subr.bf16.mxu0 0
        %480 = vmatpush2.bf16.msra.mxu0 0
        %481 = vmatprep.mubr.bf16.mxu0 0
        %482 = vmatmul.mubr.bf16.gmra.mxu0 %v256
        %v483 = vpop.f32.mrf.mxu0
        %v484 = vadd.f32 0.0, %v483
        %v485 = vpop.f32.mrf.mxu0
        %v486 = vadd.f32 0.0, %v485
        %v487 = vpop.f32.mrf.mxu0
        %v488 = vpop.f32.mrf.mxu0
        %489 = vdwg.mxu0
        %490 = vmatprep.subr.bf16.mxu0 %v416
        %491 = vmatpush1.bf16.msra.mxu0 %v415
        %492 = vmatprep.subr.bf16.mxu0 %v412
        %493 = vmatpush1.bf16.msra.mxu0 %v411
        %494 = vmatprep.subr.bf16.mxu0 %v408
        %495 = vmatpush1.bf16.msra.mxu0 %v407
        %496 = vmatprep.subr.bf16.mxu0 %v404
        %497 = vmatpush1.bf16.msra.mxu0 %v403
        %498 = vmatprep.subr.bf16.mxu0 %v400
        %499 = vmatpush1.bf16.msra.mxu0 %v399
        %500 = vmatprep.subr.bf16.mxu0 %v396
        %501 = vmatpush1.bf16.msra.mxu0 %v395
        %502 = vmatprep.subr.bf16.mxu0 %v392
        %503 = vmatpush1.bf16.msra.mxu0 %v391
        %504 = vmatprep.subr.bf16.mxu0 %v388
        %505 = vmatpush1.bf16.msra.mxu0 %v387
        %506 = vmatprep.subr.bf16.mxu0 0
        %507 = vmatpush2.bf16.msra.mxu0 0
        %508 = vmatprep.subr.bf16.mxu0 0
        %509 = vmatpush2.bf16.msra.mxu0 0
        %510 = vmatprep.subr.bf16.mxu0 0
        %511 = vmatpush2.bf16.msra.mxu0 0
        %512 = vmatprep.subr.bf16.mxu0 0
        %513 = vmatpush2.bf16.msra.mxu0 0
        %514 = vmatprep.subr.bf16.mxu0 0
        %515 = vmatpush2.bf16.msra.mxu0 0
        %516 = vmatprep.subr.bf16.mxu0 0
        %517 = vmatpush2.bf16.msra.mxu0 0
        %518 = vmatprep.subr.bf16.mxu0 0
        %519 = vmatpush2.bf16.msra.mxu0 0
        %520 = vmatprep.subr.bf16.mxu0 0
        %521 = vmatpush2.bf16.msra.mxu0 0
        %522 = vmatprep.mubr.bf16.mxu0 0
        %523 = vmatmul.mubr.bf16.gmra.mxu0 %v256
        %v524 = vpop.f32.mrf.mxu0
        %v525 = vadd.f32 0.0, %v524
        %v526 = vpop.f32.mrf.mxu0
        %v527 = vadd.f32 0.0, %v526
        %v528 = vpop.f32.mrf.mxu0
        %v529 = vpop.f32.mrf.mxu0
        %530 = vdwg.mxu0
        %vm531 = vcmp.ge.f32.partialorder %v484, 0.0
        %vm532 = vcmp.ge.f32.partialorder %v486, 0.0
        %vm533 = vcmp.ge.f32.partialorder %v525, 0.0
        %vm534 = vcmp.ge.f32.partialorder %v527, 0.0
        %v535 = vmul.f32 %v484, 0.01
        %v536 = vmul.f32 %v486, 0.01
        %v537 = vmul.f32 %v525, 0.01
        %v538 = vmul.f32 %v527, 0.01
        %v539 = vsel %vm531, %v484, %v535
        %v540 = vsel %vm532, %v486, %v536
        %v541 = vsel %vm533, %v525, %v537
        %v542 = vsel %vm534, %v527, %v538
        %v543 = vld [vmem:[%s1] sm:$0xff]
        %545 = vset.pattern.permute.xlu0 0
        %546 = vperm.xlu0 %545, %v543
        %v547 = vpop.permute.xlu0 %546
        %v549 = vmul.f32 %v539, %v547
        %v550 = vmul.f32 %v540, %v547
        %v551 = vmul.f32 %v541, %v547
        %v552 = vmul.f32 %v542, %v547
        %553 = vst [vmem:[%s253] sm:$0xff] %v549
        %554 = vst [vmem:[%s253 + $0x8] sm:$0xff] %v550
        %555 = vst [vmem:[%s253 + $0x10] sm:$0xff] %v551
        %556 = vst [vmem:[%s253 + $0x18] sm:$0xff] %v552
        %s557 = smul.u32 4, %s14
        %p558 = scmp.lt.s32.totalorder %s557, 7
        %s559 = scalar_select %p558, %s557, 7
        %s560 = smul.addr %s559, 8
        %s561 = scalar_lea.vmem %s3, %s560
        // Predicated region
        $region56: #{fem_forward.3} parent=50 // pred_check
          %p562 = pneg %p100
        $region57: #{fem_forward.3} parent=50 // pred_check_branch
          %564 = sbr.rel (%p562) target = $region59
        $region58: #{fem_forward.3} parent=50 // pred_region
          %s565 = smul.u32 4, %s14
        $region59: #{fem_forward.3} parent=50 // pred_fallthru
          _
      $region51: #{fem_forward.3} parent=5 // pred_fallthru
        _
      %p566 = scmp.le.s32.totalorder 2, %s9
      // Predicated region
      $region60: #{fem_forward.3} parent=5 // pred_check
        %p567 = pneg %p566
      $region61: #{fem_forward.3} parent=5 // pred_check_branch
        %569 = sbr.rel (%p567) target = $region63
      $region62: #{fem_forward.3} parent=5 // pred_region
        %s570 = ssub.s32 %s9, 2
        // Predicated region
        $region64: #{fem_forward.3} parent=62 // pred_check
          %p571 = pneg %p106
        $region65: #{fem_forward.3} parent=62 // pred_check_branch
          %573 = sbr.rel (%p571) target = $region67
        $region66: #{fem_forward.3} parent=62 // pred_region
          %s574 = smul.u32 4, %s15
          %p575 = scmp.lt.s32.totalorder %s574, 7
          %s576 = scalar_select %p575, %s574, 7
          %s577 = smul.addr %s576, 8
          %s578 = scalar_lea.vmem %s3, %s577
        $region67: #{fem_forward.3} parent=62 // pred_fallthru
          _
      $region63: #{fem_forward.3} parent=5 // pred_fallthru
        _
    $region6: #{fem_forward.3} parent=1 // loop_footer
      %s13 = sadd.s32 1, %s9
    $region7: #{fem_forward.3} parent=1 // loop_footer_branch
      %8 = sbr.rel target = $region3
    $region8: #{fem_forward.3} parent=1 // loop_exit
      _

// kernel: mul.2
$region0: #{mul.2}
  #allocation0 [shape = 's32[1]{0}', space=sflag, size = 0x4, scoped, tag = 'scoped memory for mul.2']
  %s0 = inlined_call_operand.<no memory space> [shape: f32[], index: 0, kind: input, shape index: {}]
  %s1 = inlined_call_operand.vmem [shape: f32[4], index: 1, kind: output, shape index: {}]
  %v2 = vstv %s0
  %3 = vst [vmem:[%s1] sm:$0x1] %v2

// kernel: fem_forward.2
$region0: #{fem_forward.2}
  #allocation0 [shape = 'u32[]', space=smem, size = 0x4, offset = 0x4, fixed_abs, tag = 'smem constant byte address 0x4 - core index']
  #allocation1 [shape = 'u32[144,128]{1,0:T(1,128)}', space=vmem, size = 0x12000, scoped, tag = 'internal scratch']
  %s0 = inlined_call_operand.vmem [shape: bf16[16,128], index: 0, kind: input, shape index: {}]
  %s1 = inlined_call_operand.vmem [shape: f32[16,1], index: 1, kind: input, shape index: {}]
  %s2 = inlined_call_operand.vmem [shape: bf16[128,1024], index: 2, kind: input, shape index: {}]
  %s3 = inlined_call_operand.vmem [shape: f32[16,1024], index: 3, kind: output, shape index: {}]
  %s4 = sld [smem:[#allocation0]]
  $region87: #{fem_forward.2} parent=0
    _
  %s6 = ssub.s32 1, %s4
  %s7 = scalar_select 0, %s6, %s4
  $region1: #{fem_forward.2} parent=0
    #allocation2 [shape = 'u8[262144]{0}', space=vmem, size = 0x40000, scoped, tag = 'input window, operand 2']
    #allocation3 [shape = 'u8[65536]{0}', space=vmem, size = 0x10000, scoped, tag = 'output window, operand 0']
    loop: start=0, step=1, limit=4
    $region2: #{fem_forward.2} parent=1 // loop_pre_header
      _
    $region3: #{fem_forward.2} parent=1 // loop_header
      %s9 = sphi 0, %s13
      %p10 = scmp.ge.s32.totalorder %s9, 4
      %s17 = sphi 0, %s17
      %s19 = sphi 0, %s17
      %s20 = sphi 0, %s19
      %s34 = sphi 0, %s20
      %s38 = sphi 0, %s38
      %s40 = sphi 0, %s38
      %s41 = sphi 0, %s40
      %s55 = sphi 0, %s41
      %s61 = sphi 0, %s63
      %s64 = sphi 0, %s61
      %s65 = sphi 0, %s64
      %s81 = sphi 0, %s65
      %s87 = sphi 0, %s89
      %s90 = sphi 0, %s87
      %s91 = sphi 0, %s90
      %s107 = sphi 0, %s91
    $region4: #{fem_forward.2} parent=1 // loop_header_branch
      %12 = sbr.rel (%p10) target = $region8
    $region5: #{fem_forward.2} parent=1 // loop_body
      %s14 = ssub.s32 %s9, 1
      %s15 = ssub.s32 %s9, 2
      %s16 = sadd.s32 %s9, 1
      %s18 = sadd.s32 %s17, 1
      %p21 = scmp.eq.s32.totalorder %s9, 1
      %p22 = scmp.ne.s32.totalorder %s17, %s19
      %p23 = scmp.eq.s32.totalorder %s9, 0
      %p24 = por %p22, %p23
      %p25 = scmp.ne.s32.totalorder %s17, %s19
      %p26 = scmp.eq.s32.totalorder %s14, 1
      %p27 = por %p25, %p26
      %p28 = scmp.ne.s32.totalorder %s19, %s20
      %p29 = scmp.eq.s32.totalorder %s14, 0
      %p30 = por %p28, %p29
      %p31 = scmp.ne.s32.totalorder %s19, %s20
      %p32 = scmp.eq.s32.totalorder %s15, 1
      %p33 = por %p31, %p32
      %p35 = scmp.ne.s32.totalorder %s20, %s34
      %p36 = scmp.eq.s32.totalorder %s15, 0
      %p37 = por %p35, %p36
      %s39 = sadd.s32 %s38, 1
      %p42 = scmp.eq.s32.totalorder %s9, 1
      %p43 = scmp.ne.s32.totalorder %s38, %s40
      %p44 = scmp.eq.s32.totalorder %s9, 0
      %p45 = por %p43, %p44
      %p46 = scmp.ne.s32.totalorder %s38, %s40
      %p47 = scmp.eq.s32.totalorder %s14, 1
      %p48 = por %p46, %p47
      %p49 = scmp.ne.s32.totalorder %s40, %s41
      %p50 = scmp.eq.s32.totalorder %s14, 0
      %p51 = por %p49, %p50
      %p52 = scmp.ne.s32.totalorder %s40, %s41
      %p53 = scmp.eq.s32.totalorder %s15, 1
      %p54 = por %p52, %p53
      %p56 = scmp.ne.s32.totalorder %s41, %s55
      %p57 = scmp.eq.s32.totalorder %s15, 0
      %p58 = por %p56, %p57
      %s59 = ssub.s32 %s9, %s16
      %p60 = scmp.eq.s32.totalorder %s59, 0
      %s62 = sadd.s32 %s61, 1
      %s63 = scalar_select %p60, %s61, %s62
      %p66 = pneg %p60
      %p67 = scmp.eq.s32.totalorder %s9, 1
      %p68 = por %p66, %p67
      %p69 = scmp.ne.s32.totalorder %s61, %s64
      %p70 = scmp.eq.s32.totalorder %s9, 0
      %p71 = por %p69, %p70
      %p72 = scmp.ne.s32.totalorder %s61, %s64
      %p73 = scmp.eq.s32.totalorder %s14, 1
      %p74 = por %p72, %p73
      %p75 = scmp.ne.s32.totalorder %s64, %s65
      %p76 = scmp.eq.s32.totalorder %s14, 0
      %p77 = por %p75, %p76
      %p78 = scmp.ne.s32.totalorder %s64, %s65
      %p79 = scmp.eq.s32.totalorder %s15, 1
      %p80 = por %p78, %p79
      %p82 = scmp.ne.s32.totalorder %s65, %s81
      %p83 = scmp.eq.s32.totalorder %s15, 0
      %p84 = por %p82, %p83
      %s85 = ssub.s32 %s9, %s16
      %p86 = scmp.eq.s32.totalorder %s85, 0
      %s88 = sadd.s32 %s87, 1
      %s89 = scalar_select %p86, %s87, %s88
      %p92 = pneg %p86
      %p93 = scmp.eq.s32.totalorder %s9, 1
      %p94 = por %p92, %p93
      %p95 = scmp.ne.s32.totalorder %s87, %s90
      %p96 = scmp.eq.s32.totalorder %s9, 0
      %p97 = por %p95, %p96
      %p98 = scmp.ne.s32.totalorder %s87, %s90
      %p99 = scmp.eq.s32.totalorder %s14, 1
      %p100 = por %p98, %p99
      %p101 = scmp.ne.s32.totalorder %s90, %s91
      %p102 = scmp.eq.s32.totalorder %s14, 0
      %p103 = por %p101, %p102
      %p104 = scmp.ne.s32.totalorder %s90, %s91
      %p105 = scmp.eq.s32.totalorder %s15, 1
      %p106 = por %p104, %p105
      %p108 = scmp.ne.s32.totalorder %s91, %s107
      %p109 = scmp.eq.s32.totalorder %s15, 0
      %p110 = por %p108, %p109
      %p111 = scmp.le.s32.totalorder 1, %s9
      %p112 = scmp.lt.s32.totalorder %s9, 3
      %p113 = pnand %p111, %p112
      %p114 = pneg %p113
      // Predicated region
      $region9: #{fem_forward.2} parent=5 // pred_check
        _
      $region10: #{fem_forward.2} parent=5 // pred_check_branch
        %116 = sbr.rel (%p113) target = $region12
      $region11: #{fem_forward.2} parent=5 // pred_region
        %s117 = ssub.s32 %s9, 1
        // Predicated region
        $region13: #{fem_forward.2} parent=11 // pred_check
          %p118 = pneg %p30
        $region14: #{fem_forward.2} parent=11 // pred_check_branch
          %120 = sbr.rel (%p118) target = $region16
        $region15: #{fem_forward.2} parent=11 // pred_region
          _
        $region16: #{fem_forward.2} parent=11 // pred_fallthru
          _
        // Predicated region
        $region17: #{fem_forward.2} parent=11 // pred_check
          %p121 = pneg %p51
        $region18: #{fem_forward.2} parent=11 // pred_check_branch
          %123 = sbr.rel (%p121) target = $region20
        $region19: #{fem_forward.2} parent=11 // pred_region
          _
        $region20: #{fem_forward.2} parent=11 // pred_fallthru
          _
      $region12: #{fem_forward.2} parent=5 // pred_fallthru
        _
      %p124 = scmp.lt.s32.totalorder %s9, 2
      // Predicated region
      $region21: #{fem_forward.2} parent=5 // pred_check
        %p125 = pneg %p124
      $region22: #{fem_forward.2} parent=5 // pred_check_branch
        %127 = sbr.rel (%p125) target = $region24
      $region23: #{fem_forward.2} parent=5 // pred_region
        // Predicated region
        $region25: #{fem_forward.2} parent=23 // pred_check
          %p128 = pneg %p71
        $region26: #{fem_forward.2} parent=23 // pred_check_branch
          %130 = sbr.rel (%p128) target = $region28
        $region27: #{fem_forward.2} parent=23 // pred_region
          %s131 = sand.u32 %s61, 1
          %s132 = sand.u32 %s61, 1
          %s133 = smul.addr %s132, 256
          %s134 = scalar_lea.vmem [#allocation2], %s133
          %s135 = smul.u32 4, %s9
          %s136 = smul.addr %s135, 4
          %s137 = scalar_lea.vmem %s2, %s136
          // Predicated region
          $region29: #{fem_forward.2} parent=27 // pred_check
            _
          $region30: #{fem_forward.2} parent=27 // pred_check_branch
            %139 = sbr.rel (0) target = $region32
          $region31: #{fem_forward.2} parent=27 // pred_region
            // Predicated region
            $region33: #{fem_forward.2} parent=31 // pred_check
              _
            $region34: #{fem_forward.2} parent=31 // pred_check_branch
              %141 = sbr.rel (0) target = $region36
            $region35: #{fem_forward.2} parent=31 // pred_region
              loop: start=0, step=1, limit=1
              $region37: #{fem_forward.2} parent=35 // loop_pre_header
                _
              $region38: #{fem_forward.2} parent=35 // loop_header
                %s143 = sphi 0, %s147
                %p144 = scmp.ge.s32.totalorder %s143, 1
                %s148 = sphi %s137, %s137
                %s149 = sphi %s134, %s134
              $region39: #{fem_forward.2} parent=35 // loop_header_branch
                %146 = sbr.rel (%p144) target = $region43
              $region40: #{fem_forward.2} parent=35 // loop_body
                %v150 = vld [vmem:[%s148] sm:$0xff]
                %151 = vst [vmem:[%s149] sm:$0xff] %v150
                %v152 = vld [vmem:[%s148 + $0x8] sm:$0xff]
                %153 = vst [vmem:[%s149 + $0x8] sm:$0xff] %v152
                %v154 = vld [vmem:[%s148 + $0x20] sm:$0xff]
                %155 = vst [vmem:[%s149 + $0x10] sm:$0xff] %v154
                %v156 = vld [vmem:[%s148 + $0x28] sm:$0xff]
                %157 = vst [vmem:[%s149 + $0x18] sm:$0xff] %v156
                %v158 = vld [vmem:[%s148 + $0x40] sm:$0xff]
                %159 = vst [vmem:[%s149 + $0x20] sm:$0xff] %v158
                %v160 = vld [vmem:[%s148 + $0x48] sm:$0xff]
                %161 = vst [vmem:[%s149 + $0x28] sm:$0xff] %v160
                %v162 = vld [vmem:[%s148 + $0x60] sm:$0xff]
                %163 = vst [vmem:[%s149 + $0x30] sm:$0xff] %v162
                %v164 = vld [vmem:[%s148 + $0x68] sm:$0xff]
                %165 = vst [vmem:[%s149 + $0x38] sm:$0xff] %v164
                %v166 = vld [vmem:[%s148 + $0x80] sm:$0xff]
                %167 = vst [vmem:[%s149 + $0x40] sm:$0xff] %v166
                %v168 = vld [vmem:[%s148 + $0x88] sm:$0xff]
                %169 = vst [vmem:[%s149 + $0x48] sm:$0xff] %v168
                %v170 = vld [vmem:[%s148 + $0xa0] sm:$0xff]
                %171 = vst [vmem:[%s149 + $0x50] sm:$0xff] %v170
                %v172 = vld [vmem:[%s148 + $0xa8] sm:$0xff]
                %173 = vst [vmem:[%s149 + $0x58] sm:$0xff] %v172
                %v174 = vld [vmem:[%s148 + $0xc0] sm:$0xff]
                %175 = vst [vmem:[%s149 + $0x60] sm:$0xff] %v174
                %v176 = vld [vmem:[%s148 + $0xc8] sm:$0xff]
                %177 = vst [vmem:[%s149 + $0x68] sm:$0xff] %v176
                %v178 = vld [vmem:[%s148 + $0xe0] sm:$0xff]
                %179 = vst [vmem:[%s149 + $0x70] sm:$0xff] %v178
                %v180 = vld [vmem:[%s148 + $0xe8] sm:$0xff]
                %181 = vst [vmem:[%s149 + $0x78] sm:$0xff] %v180
                %v182 = vld [vmem:[%s148 + $0x100] sm:$0xff]
                %183 = vst [vmem:[%s149 + $0x80] sm:$0xff] %v182
                %v184 = vld [vmem:[%s148 + $0x108] sm:$0xff]
                %185 = vst [vmem:[%s149 + $0x88] sm:$0xff] %v184
                %v186 = vld [vmem:[%s148 + $0x120] sm:$0xff]
                %187 = vst [vmem:[%s149 + $0x90] sm:$0xff] %v186
                %v188 = vld [vmem:[%s148 + $0x128] sm:$0xff]
                %189 = vst [vmem:[%s149 + $0x98] sm:$0xff] %v188
                %v190 = vld [vmem:[%s148 + $0x140] sm:$0xff]
                %191 = vst [vmem:[%s149 + $0xa0] sm:$0xff] %v190
                %v192 = vld [vmem:[%s148 + $0x148] sm:$0xff]
                %193 = vst [vmem:[%s149 + $0xa8] sm:$0xff] %v192
                %v194 = vld [vmem:[%s148 + $0x160] sm:$0xff]
                %195 = vst [vmem:[%s149 + $0xb0] sm:$0xff] %v194
                %v196 = vld [vmem:[%s148 + $0x168] sm:$0xff]
                %197 = vst [vmem:[%s149 + $0xb8] sm:$0xff] %v196
                %v198 = vld [vmem:[%s148 + $0x180] sm:$0xff]
                %199 = vst [vmem:[%s149 + $0xc0] sm:$0xff] %v198
                %v200 = vld [vmem:[%s148 + $0x188] sm:$0xff]
                %201 = vst [vmem:[%s149 + $0xc8] sm:$0xff] %v200
                %v202 = vld [vmem:[%s148 + $0x1a0] sm:$0xff]
                %203 = vst [vmem:[%s149 + $0xd0] sm:$0xff] %v202
                %v204 = vld [vmem:[%s148 + $0x1a8] sm:$0xff]
                %205 = vst [vmem:[%s149 + $0xd8] sm:$0xff] %v204
                %v206 = vld [vmem:[%s148 + $0x1c0] sm:$0xff]
                %207 = vst [vmem:[%s149 + $0xe0] sm:$0xff] %v206
                %v208 = vld [vmem:[%s148 + $0x1c8] sm:$0xff]
                %209 = vst [vmem:[%s149 + $0xe8] sm:$0xff] %v208
                %v210 = vld [vmem:[%s148 + $0x1e0] sm:$0xff]
                %211 = vst [vmem:[%s149 + $0xf0] sm:$0xff] %v210
                %v212 = vld [vmem:[%s148 + $0x1e8] sm:$0xff]
                %213 = vst [vmem:[%s149 + $0xf8] sm:$0xff] %v212
              $region41: #{fem_forward.2} parent=35 // loop_footer
                %s147 = sadd.s32 1, %s143
              $region42: #{fem_forward.2} parent=35 // loop_footer_branch
                %142 = sbr.rel target = $region38
              $region43: #{fem_forward.2} parent=35 // loop_exit
                _
            $region36: #{fem_forward.2} parent=31 // pred_fallthru
              _
            // Predicated region
            $region44: #{fem_forward.2} parent=31 // pred_check
              _
            $region45: #{fem_forward.2} parent=31 // pred_check_branch
              %215 = sbr.rel target = $region47
            $region46: #{fem_forward.2} parent=31 // pred_region
              _
            $region47: #{fem_forward.2} parent=31 // pred_fallthru
              _
          $region32: #{fem_forward.2} parent=27 // pred_fallthru
            _
          %216 = vnop
        $region28: #{fem_forward.2} parent=23 // pred_fallthru
          _
      $region24: #{fem_forward.2} parent=5 // pred_fallthru
        _
      %p217 = scmp.le.s32.totalorder 1, %s9
      %p218 = scmp.lt.s32.totalorder %s9, 3
      %p219 = pnand %p217, %p218
      %p220 = pneg %p219
      // Predicated region
      $region48: #{fem_forward.2} parent=5 // pred_check
        _
      $region49: #{fem_forward.2} parent=5 // pred_check_branch
        %222 = sbr.rel (%p219) target = $region51
      $region50: #{fem_forward.2} parent=5 // pred_region
        %s223 = ssub.s32 %s9, 1
        %s224 = sand.u32 %s64, 1
        %s225 = sand.u32 %s64, 1
        %s226 = smul.addr %s225, 256
        %s227 = scalar_lea.vmem [#allocation2], %s226
        // Predicated region
        $region52: #{fem_forward.2} parent=50 // pred_check
          %p228 = pneg %p77
        $region53: #{fem_forward.2} parent=50 // pred_check_branch
          %230 = sbr.rel (%p228) target = $region55
        $region54: #{fem_forward.2} parent=50 // pred_region
          _
        $region55: #{fem_forward.2} parent=50 // pred_fallthru
          _
        %p231 = pneg %p30
        %p232 = pneg %p27
        %p233 = pneg %p51
        %p234 = pneg %p48
        %s235 = sand.u32 %s64, 1
        %s236 = sand.u32 %s64, 1
        %s237 = smul.addr %s236, 256
        %s238 = scalar_lea.vmem [#allocation2], %s237
        %p239 = pneg %p77
        %p240 = pneg %p74
        %p241 = pneg %p103
        %p242 = pneg %p100
        %s243 = sand.u32 %s90, 1
        %s244 = sand.u32 %s90, 1
        %s245 = smul.addr %s244, 64
        %s246 = scalar_lea.vmem [#allocation3], %s245
        %s247 = smul.u32 4, %s14
        %s248 = smul.u32 4, %s14
        %v250 = vld [vmem:[%s0] sm:$0xf]
        %v251 = vld [vmem:[%s0 + $0x4] sm:$0xf]
        %v252 = vld [vmem:[%s227] sm:$0xff]
        %v253 = vld [vmem:[%s227 + $0x8] sm:$0xff]
        %v254 = vld [vmem:[%s227 + $0x10] sm:$0xff]
        %v255 = vld [vmem:[%s227 + $0x18] sm:$0xff]
        %v256 = vld [vmem:[%s227 + $0x20] sm:$0xff]
        %v257 = vld [vmem:[%s227 + $0x28] sm:$0xff]
        %v258 = vld [vmem:[%s227 + $0x30] sm:$0xff]
        %v259 = vld [vmem:[%s227 + $0x38] sm:$0xff]
        %v260 = vld [vmem:[%s227 + $0x40] sm:$0xff]
        %v261 = vld [vmem:[%s227 + $0x48] sm:$0xff]
        %v262 = vld [vmem:[%s227 + $0x50] sm:$0xff]
        %v263 = vld [vmem:[%s227 + $0x58] sm:$0xff]
        %v264 = vld [vmem:[%s227 + $0x60] sm:$0xff]
        %v265 = vld [vmem:[%s227 + $0x68] sm:$0xff]
        %v266 = vld [vmem:[%s227 + $0x70] sm:$0xff]
        %v267 = vld [vmem:[%s227 + $0x78] sm:$0xff]
        %v268 = vld [vmem:[%s227 + $0x80] sm:$0xff]
        %v269 = vld [vmem:[%s227 + $0x88] sm:$0xff]
        %v270 = vld [vmem:[%s227 + $0x90] sm:$0xff]
        %v271 = vld [vmem:[%s227 + $0x98] sm:$0xff]
        %v272 = vld [vmem:[%s227 + $0xa0] sm:$0xff]
        %v273 = vld [vmem:[%s227 + $0xa8] sm:$0xff]
        %v274 = vld [vmem:[%s227 + $0xb0] sm:$0xff]
        %v275 = vld [vmem:[%s227 + $0xb8] sm:$0xff]
        %v276 = vld [vmem:[%s227 + $0xc0] sm:$0xff]
        %v277 = vld [vmem:[%s227 + $0xc8] sm:$0xff]
        %v278 = vld [vmem:[%s227 + $0xd0] sm:$0xff]
        %v279 = vld [vmem:[%s227 + $0xd8] sm:$0xff]
        %v280 = vld [vmem:[%s227 + $0xe0] sm:$0xff]
        %v281 = vld [vmem:[%s227 + $0xe8] sm:$0xff]
        %v282 = vld [vmem:[%s227 + $0xf0] sm:$0xff]
        %v283 = vld [vmem:[%s227 + $0xf8] sm:$0xff]
        %v286 = vunpack.c.l.b16 %v250
        %v287 = vunpack.c.l.b16 %v251
        %v288 = vpack.c.b16 %v287, %v286
        %v322 = vunpack.c.l.b16 %v252
        %v323 = vunpack.c.h.b16 %v252
        %v324 = vunpack.c.l.b16 %v253
        %v325 = vunpack.c.h.b16 %v253
        %v326 = vunpack.c.l.b16 %v254
        %v327 = vunpack.c.h.b16 %v254
        %v328 = vunpack.c.l.b16 %v255
        %v329 = vunpack.c.h.b16 %v255
        %v330 = vunpack.c.l.b16 %v256
        %v331 = vunpack.c.h.b16 %v256
        %v332 = vunpack.c.l.b16 %v257
        %v333 = vunpack.c.h.b16 %v257
        %v334 = vunpack.c.l.b16 %v258
        %v335 = vunpack.c.h.b16 %v258
        %v336 = vunpack.c.l.b16 %v259
        %v337 = vunpack.c.h.b16 %v259
        %v338 = vunpack.c.l.b16 %v260
        %v339 = vunpack.c.h.b16 %v260
        %v340 = vunpack.c.l.b16 %v261
        %v341 = vunpack.c.h.b16 %v261
        %v342 = vunpack.c.l.b16 %v262
        %v343 = vunpack.c.h.b16 %v262
        %v344 = vunpack.c.l.b16 %v263
        %v345 = vunpack.c.h.b16 %v263
        %v346 = vunpack.c.l.b16 %v264
        %v347 = vunpack.c.h.b16 %v264
        %v348 = vunpack.c.l.b16 %v265
        %v349 = vunpack.c.h.b16 %v265
        %v350 = vunpack.c.l.b16 %v266
        %v351 = vunpack.c.h.b16 %v266
        %v352 = vunpack.c.l.b16 %v267
        %v353 = vunpack.c.h.b16 %v267
        %v354 = vunpack.c.l.b16 %v268
        %v355 = vunpack.c.h.b16 %v268
        %v356 = vunpack.c.l.b16 %v269
        %v357 = vunpack.c.h.b16 %v269
        %v358 = vunpack.c.l.b16 %v270
        %v359 = vunpack.c.h.b16 %v270
        %v360 = vunpack.c.l.b16 %v271
        %v361 = vunpack.c.h.b16 %v271
        %v362 = vunpack.c.l.b16 %v272
        %v363 = vunpack.c.h.b16 %v272
        %v364 = vunpack.c.l.b16 %v273
        %v365 = vunpack.c.h.b16 %v273
        %v366 = vunpack.c.l.b16 %v274
        %v367 = vunpack.c.h.b16 %v274
        %v368 = vunpack.c.l.b16 %v275
        %v369 = vunpack.c.h.b16 %v275
        %v370 = vunpack.c.l.b16 %v276
        %v371 = vunpack.c.h.b16 %v276
        %v372 = vunpack.c.l.b16 %v277
        %v373 = vunpack.c.h.b16 %v277
        %v374 = vunpack.c.l.b16 %v278
        %v375 = vunpack.c.h.b16 %v278
        %v376 = vunpack.c.l.b16 %v279
        %v377 = vunpack.c.h.b16 %v279
        %v378 = vunpack.c.l.b16 %v280
        %v379 = vunpack.c.h.b16 %v280
        %v380 = vunpack.c.l.b16 %v281
        %v381 = vunpack.c.h.b16 %v281
        %v382 = vunpack.c.l.b16 %v282
        %v383 = vunpack.c.h.b16 %v282
        %v384 = vunpack.c.l.b16 %v283
        %v385 = vunpack.c.h.b16 %v283
        %v386 = vpack.c.b16 %v326, %v322
        %v387 = vpack.c.b16 %v327, %v323
        %v388 = vpack.c.b16 %v328, %v324
        %v389 = vpack.c.b16 %v329, %v325
        %v390 = vpack.c.b16 %v334, %v330
        %v391 = vpack.c.b16 %v335, %v331
        %v392 = vpack.c.b16 %v336, %v332
        %v393 = vpack.c.b16 %v337, %v333
        %v394 = vpack.c.b16 %v342, %v338
        %v395 = vpack.c.b16 %v343, %v339
        %v396 = vpack.c.b16 %v344, %v340
        %v397 = vpack.c.b16 %v345, %v341
        %v398 = vpack.c.b16 %v350, %v346
        %v399 = vpack.c.b16 %v351, %v347
        %v400 = vpack.c.b16 %v352, %v348
        %v401 = vpack.c.b16 %v353, %v349
        %v402 = vpack.c.b16 %v358, %v354
        %v403 = vpack.c.b16 %v359, %v355
        %v404 = vpack.c.b16 %v360, %v356
        %v405 = vpack.c.b16 %v361, %v357
        %v406 = vpack.c.b16 %v366, %v362
        %v407 = vpack.c.b16 %v367, %v363
        %v408 = vpack.c.b16 %v368, %v364
        %v409 = vpack.c.b16 %v369, %v365
        %v410 = vpack.c.b16 %v374, %v370
        %v411 = vpack.c.b16 %v375, %v371
        %v412 = vpack.c.b16 %v376, %v372
        %v413 = vpack.c.b16 %v377, %v373
        %v414 = vpack.c.b16 %v382, %v378
        %v415 = vpack.c.b16 %v383, %v379
        %v416 = vpack.c.b16 %v384, %v380
        %v417 = vpack.c.b16 %v385, %v381
        %450 = vmatprep.subr.bf16.mxu0 %v415
        %451 = vmatpush1.bf16.msra.mxu0 %v414
        %452 = vmatprep.subr.bf16.mxu0 %v411
        %453 = vmatpush1.bf16.msra.mxu0 %v410
        %454 = vmatprep.subr.bf16.mxu0 %v407
        %455 = vmatpush1.bf16.msra.mxu0 %v406
        %456 = vmatprep.subr.bf16.mxu0 %v403
        %457 = vmatpush1.bf16.msra.mxu0 %v402
        %458 = vmatprep.subr.bf16.mxu0 %v399
        %459 = vmatpush1.bf16.msra.mxu0 %v398
        %460 = vmatprep.subr.bf16.mxu0 %v395
        %461 = vmatpush1.bf16.msra.mxu0 %v394
        %462 = vmatprep.subr.bf16.mxu0 %v391
        %463 = vmatpush1.bf16.msra.mxu0 %v390
        %464 = vmatprep.subr.bf16.mxu0 %v387
        %465 = vmatpush1.bf16.msra.mxu0 %v386
        %466 = vmatprep.subr.bf16.mxu0 0
        %467 = vmatpush2.bf16.msra.mxu0 0
        %468 = vmatprep.subr.bf16.mxu0 0
        %469 = vmatpush2.bf16.msra.mxu0 0
        %470 = vmatprep.subr.bf16.mxu0 0
        %471 = vmatpush2.bf16.msra.mxu0 0
        %472 = vmatprep.subr.bf16.mxu0 0
        %473 = vmatpush2.bf16.msra.mxu0 0
        %474 = vmatprep.subr.bf16.mxu0 0
        %475 = vmatpush2.bf16.msra.mxu0 0
        %476 = vmatprep.subr.bf16.mxu0 0
        %477 = vmatpush2.bf16.msra.mxu0 0
        %478 = vmatprep.subr.bf16.mxu0 0
        %479 = vmatpush2.bf16.msra.mxu0 0
        %480 = vmatprep.subr.bf16.mxu0 0
        %481 = vmatpush2.bf16.msra.mxu0 0
        %482 = vmatprep.mubr.bf16.mxu0 0
        %483 = vmatmul.mubr.bf16.gmra.mxu0 %v288
        %v484 = vpop.f32.mrf.mxu0
        %v485 = vadd.f32 0.0, %v484
        %v486 = vpop.f32.mrf.mxu0
        %v487 = vadd.f32 0.0, %v486
        %v488 = vpop.f32.mrf.mxu0
        %v489 = vadd.f32 0.0, %v488
        %v490 = vpop.f32.mrf.mxu0
        %v491 = vadd.f32 0.0, %v490
        %492 = vdwg.mxu0
        %493 = vmatprep.subr.bf16.mxu0 %v417
        %494 = vmatpush1.bf16.msra.mxu0 %v416
        %495 = vmatprep.subr.bf16.mxu0 %v413
        %496 = vmatpush1.bf16.msra.mxu0 %v412
        %497 = vmatprep.subr.bf16.mxu0 %v409
        %498 = vmatpush1.bf16.msra.mxu0 %v408
        %499 = vmatprep.subr.bf16.mxu0 %v405
        %500 = vmatpush1.bf16.msra.mxu0 %v404
        %501 = vmatprep.subr.bf16.mxu0 %v401
        %502 = vmatpush1.bf16.msra.mxu0 %v400
        %503 = vmatprep.subr.bf16.mxu0 %v397
        %504 = vmatpush1.bf16.msra.mxu0 %v396
        %505 = vmatprep.subr.bf16.mxu0 %v393
        %506 = vmatpush1.bf16.msra.mxu0 %v392
        %507 = vmatprep.subr.bf16.mxu0 %v389
        %508 = vmatpush1.bf16.msra.mxu0 %v388
        %509 = vmatprep.subr.bf16.mxu0 0
        %510 = vmatpush2.bf16.msra.mxu0 0
        %511 = vmatprep.subr.bf16.mxu0 0
        %512 = vmatpush2.bf16.msra.mxu0 0
        %513 = vmatprep.subr.bf16.mxu0 0
        %514 = vmatpush2.bf16.msra.mxu0 0
        %515 = vmatprep.subr.bf16.mxu0 0
        %516 = vmatpush2.bf16.msra.mxu0 0
        %517 = vmatprep.subr.bf16.mxu0 0
        %518 = vmatpush2.bf16.msra.mxu0 0
        %519 = vmatprep.subr.bf16.mxu0 0
        %520 = vmatpush2.bf16.msra.mxu0 0
        %521 = vmatprep.subr.bf16.mxu0 0
        %522 = vmatpush2.bf16.msra.mxu0 0
        %523 = vmatprep.subr.bf16.mxu0 0
        %524 = vmatpush2.bf16.msra.mxu0 0
        %525 = vmatprep.mubr.bf16.mxu0 0
        %526 = vmatmul.mubr.bf16.gmra.mxu0 %v288
        %v527 = vpop.f32.mrf.mxu0
        %v528 = vadd.f32 0.0, %v527
        %v529 = vpop.f32.mrf.mxu0
        %v530 = vadd.f32 0.0, %v529
        %v531 = vpop.f32.mrf.mxu0
        %v532 = vadd.f32 0.0, %v531
        %v533 = vpop.f32.mrf.mxu0
        %v534 = vadd.f32 0.0, %v533
        %535 = vdwg.mxu0
        %vm536 = vcmp.ge.f32.partialorder %v485, 0.0
        %vm537 = vcmp.ge.f32.partialorder %v487, 0.0
        %vm538 = vcmp.ge.f32.partialorder %v528, 0.0
        %vm539 = vcmp.ge.f32.partialorder %v530, 0.0
        %vm540 = vcmp.ge.f32.partialorder %v489, 0.0
        %vm541 = vcmp.ge.f32.partialorder %v491, 0.0
        %vm542 = vcmp.ge.f32.partialorder %v532, 0.0
        %vm543 = vcmp.ge.f32.partialorder %v534, 0.0
        %v544 = vmul.f32 %v485, 0.01
        %v545 = vmul.f32 %v487, 0.01
        %v546 = vmul.f32 %v528, 0.01
        %v547 = vmul.f32 %v530, 0.01
        %v548 = vmul.f32 %v489, 0.01
        %v549 = vmul.f32 %v491, 0.01
        %v550 = vmul.f32 %v532, 0.01
        %v551 = vmul.f32 %v534, 0.01
        %v552 = vsel %vm536, %v485, %v544
        %v553 = vsel %vm537, %v487, %v545
        %v554 = vsel %vm538, %v528, %v546
        %v555 = vsel %vm539, %v530, %v547
        %v556 = vsel %vm540, %v489, %v548
        %v557 = vsel %vm541, %v491, %v549
        %v558 = vsel %vm542, %v532, %v550
        %v559 = vsel %vm543, %v534, %v551
        %v560 = vld [vmem:[%s1] sm:$0xff]
        %v561 = vld [vmem:[%s1 + $0x8] sm:$0xff]
        %563 = vset.pattern.permute.xlu0 0
        %564 = vperm.xlu0 %563, %v560
        %v565 = vpop.permute.xlu0 %564
        %568 = vset.pattern.permute.xlu0 0
        %569 = vperm.xlu0 %568, %v561
        %v570 = vpop.permute.xlu0 %569
        %v572 = vmul.f32 %v552, %v565
        %v573 = vmul.f32 %v553, %v565
        %v574 = vmul.f32 %v554, %v565
        %v575 = vmul.f32 %v555, %v565
        %v576 = vmul.f32 %v556, %v570
        %v577 = vmul.f32 %v557, %v570
        %v578 = vmul.f32 %v558, %v570
        %v579 = vmul.f32 %v559, %v570
        %580 = vst [vmem:[%s246] sm:$0xff] %v572
        %581 = vst [vmem:[%s246 + $0x8] sm:$0xff] %v573
        %582 = vst [vmem:[%s246 + $0x10] sm:$0xff] %v574
        %583 = vst [vmem:[%s246 + $0x18] sm:$0xff] %v575
        %584 = vst [vmem:[%s246 + $0x20] sm:$0xff] %v576
        %585 = vst [vmem:[%s246 + $0x28] sm:$0xff] %v577
        %586 = vst [vmem:[%s246 + $0x30] sm:$0xff] %v578
        %587 = vst [vmem:[%s246 + $0x38] sm:$0xff] %v579
        %s588 = sand.u32 %s90, 1
        %s589 = sand.u32 %s90, 1
        %s590 = smul.addr %s589, 64
        %s591 = scalar_lea.vmem [#allocation3], %s590
        // Predicated region
        $region56: #{fem_forward.2} parent=50 // pred_check
          %p592 = pneg %p100
        $region57: #{fem_forward.2} parent=50 // pred_check_branch
          %594 = sbr.rel (%p592) target = $region59
        $region58: #{fem_forward.2} parent=50 // pred_region
          %s595 = smul.u32 4, %s14
          %s596 = smul.addr %s595, 8
          %s597 = scalar_lea.vmem %s3, %s596
          // Predicated region
          $region60: #{fem_forward.2} parent=58 // pred_check
            _
          $region61: #{fem_forward.2} parent=58 // pred_check_branch
            %599 = sbr.rel (0) target = $region63
          $region62: #{fem_forward.2} parent=58 // pred_region
            // Predicated region
            $region64: #{fem_forward.2} parent=62 // pred_check
              _
            $region65: #{fem_forward.2} parent=62 // pred_check_branch
              %601 = sbr.rel (0) target = $region67
            $region66: #{fem_forward.2} parent=62 // pred_region
              loop: start=0, step=1, limit=1
              $region68: #{fem_forward.2} parent=66 // loop_pre_header
                _
              $region69: #{fem_forward.2} parent=66 // loop_header
                %s603 = sphi 0, %s607
                %p604 = scmp.ge.s32.totalorder %s603, 1
                %s608 = sphi %s591, %s591
                %s609 = sphi %s597, %s597
              $region70: #{fem_forward.2} parent=66 // loop_header_branch
                %606 = sbr.rel (%p604) target = $region74
              $region71: #{fem_forward.2} parent=66 // loop_body
                %v610 = vld [vmem:[%s608] sm:$0xff]
                %611 = vst [vmem:[%s609] sm:$0xff] %v610
                %v612 = vld [vmem:[%s608 + $0x8] sm:$0xff]
                %613 = vst [vmem:[%s609 + $0x8] sm:$0xff] %v612
                %v614 = vld [vmem:[%s608 + $0x10] sm:$0xff]
                %615 = vst [vmem:[%s609 + $0x10] sm:$0xff] %v614
                %v616 = vld [vmem:[%s608 + $0x18] sm:$0xff]
                %617 = vst [vmem:[%s609 + $0x18] sm:$0xff] %v616
                %v618 = vld [vmem:[%s608 + $0x20] sm:$0xff]
                %619 = vst [vmem:[%s609 + $0x40] sm:$0xff] %v618
                %v620 = vld [vmem:[%s608 + $0x28] sm:$0xff]
                %621 = vst [vmem:[%s609 + $0x48] sm:$0xff] %v620
                %v622 = vld [vmem:[%s608 + $0x30] sm:$0xff]
                %623 = vst [vmem:[%s609 + $0x50] sm:$0xff] %v622
                %v624 = vld [vmem:[%s608 + $0x38] sm:$0xff]
                %625 = vst [vmem:[%s609 + $0x58] sm:$0xff] %v624
              $region72: #{fem_forward.2} parent=66 // loop_footer
                %s607 = sadd.s32 1, %s603
              $region73: #{fem_forward.2} parent=66 // loop_footer_branch
                %602 = sbr.rel target = $region69
              $region74: #{fem_forward.2} parent=66 // loop_exit
                _
            $region67: #{fem_forward.2} parent=62 // pred_fallthru
              _
            // Predicated region
            $region75: #{fem_forward.2} parent=62 // pred_check
              _
            $region76: #{fem_forward.2} parent=62 // pred_check_branch
              %627 = sbr.rel target = $region78
            $region77: #{fem_forward.2} parent=62 // pred_region
              _
            $region78: #{fem_forward.2} parent=62 // pred_fallthru
              _
          $region63: #{fem_forward.2} parent=58 // pred_fallthru
            _
          %628 = vnop
        $region59: #{fem_forward.2} parent=50 // pred_fallthru
          _
      $region51: #{fem_forward.2} parent=5 // pred_fallthru
        _
      %p629 = scmp.le.s32.totalorder 2, %s9
      // Predicated region
      $region79: #{fem_forward.2} parent=5 // pred_check
        %p630 = pneg %p629
      $region80: #{fem_forward.2} parent=5 // pred_check_branch
        %632 = sbr.rel (%p630) target = $region82
      $region81: #{fem_forward.2} parent=5 // pred_region
        %s633 = ssub.s32 %s9, 2
        // Predicated region
        $region83: #{fem_forward.2} parent=81 // pred_check
          %p634 = pneg %p106
        $region84: #{fem_forward.2} parent=81 // pred_check_branch
          %636 = sbr.rel (%p634) target = $region86
        $region85: #{fem_forward.2} parent=81 // pred_region
          %s637 = sand.u32 %s91, 1
          %s638 = sand.u32 %s91, 1
          %s639 = smul.addr %s638, 64
          %s640 = scalar_lea.vmem [#allocation3], %s639
        $region86: #{fem_forward.2} parent=81 // pred_fallthru
          _
      $region82: #{fem_forward.2} parent=5 // pred_fallthru
        _
    $region6: #{fem_forward.2} parent=1 // loop_footer
      %s13 = sadd.s32 1, %s9
    $region7: #{fem_forward.2} parent=1 // loop_footer_branch
      %8 = sbr.rel target = $region3
    $region8: #{fem_forward.2} parent=1 // loop_exit
      _

</llo_original>
